<compile_context>
chip_gen: v5e
topology: v5e:2x2
jax: 0.10.0
libtpu: 0.0.40
codegen_flags: <defaults>
</compile_context>

<pallas_src>
import functools

import jax
import jax.numpy as jnp
from jax.experimental import pallas as pl
from jax.experimental.pallas import tpu as pltpu


def _triplet_row_loss_kernel(a_ref, p_ref, n_ref, o_ref, *, margin):
    """One (block_b, D) tile of each input -> (block_b, 1) per-row hinge loss."""
    a = a_ref[...].astype(jnp.float32)
    p = p_ref[...].astype(jnp.float32)
    n = n_ref[...].astype(jnp.float32)
    # dp - dn = sum((a-p)^2 - (a-n)^2, axis=1) = sum((n - p) * (2a - p - n), axis=1)
    diff = jnp.sum((n - p) * (2.0 * a - p - n), axis=1, keepdims=True)  # (block_b, 1)
    o_ref[...] = jnp.maximum(diff + margin, 0.0)


def triplet_loss(anchor, positive, negative, margin=1.0,
                 *, vmem_tile_budget_bytes=24 << 20):
    """Pallas implementation of TripletLoss.forward for 2-D (B, D) inputs."""
    B, D = anchor.shape
    itemsize = jnp.dtype(anchor.dtype).itemsize
    # sublane alignment per dtype (f32 -> 8 rows, bf16 -> 16 rows)
    sub = 8 if itemsize >= 4 else (16 if itemsize == 2 else 32)

    # Budget: 3 inputs x 2 pipeline buffers x (block_b, D) tile must fit the
    # tile budget (conservative enough for v7x's 64 MiB physical VMEM).
    per_row_stream_bytes = 3 * 2 * D * itemsize
    max_rows = max(sub, (vmem_tile_budget_bytes // per_row_stream_bytes) // sub * sub)

    b_pad_min = -(-B // sub) * sub          # B rounded up to sublane multiple
    block_b = min(max_rows, b_pad_min)      # tiny problems -> single block, grid=(1,)
    B_pad = -(-B // block_b) * block_b      # pad batch to a whole number of tiles

    if B_pad != B:
        pad = ((0, B_pad - B), (0, 0))
        anchor = jnp.pad(anchor, pad)
        positive = jnp.pad(positive, pad)
        negative = jnp.pad(negative, pad)

    grid = (B_pad // block_b,)

    # Raise scoped VMEM above the v5e default; sized for the double-buffered
    # tiles plus slack, capped well under v7x's 64 MiB physical VMEM.
    tile_bytes = 3 * 2 * block_b * D * itemsize + 2 * block_b * 4
    vmem_limit = max(16 << 20, min(48 << 20, int(tile_bytes) + (8 << 20)))

    kernel = functools.partial(_triplet_row_loss_kernel, margin=float(margin))

    in_spec = pl.BlockSpec((block_b, D), lambda i: (i, 0))
    losses = pl.pallas_call(
        kernel,
        out_shape=jax.ShapeDtypeStruct((B_pad, 1), jnp.float32),
        grid_spec=pltpu.PrefetchScalarGridSpec(
            num_scalar_prefetch=0,
            grid=grid,
            in_specs=[in_spec, in_spec, in_spec],
            out_specs=pl.BlockSpec((block_b, 1), lambda i: (i, 0)),
        ),
        compiler_params=pltpu.CompilerParams(
            dimension_semantics=("parallel",),   # independent batch tiles
            vmem_limit_bytes=vmem_limit,
        ),
    )(anchor, positive, negative)

    # Final mean over the TRUE batch (padded rows sliced away first).
    return jnp.mean(losses[:B, 0])


def triplet_loss_ref(anchor, positive, negative, margin=1.0):
    dp = jnp.sum((anchor - positive) ** 2, axis=1)
    dn = jnp.sum((anchor - negative) ** 2, axis=1)
    return jnp.mean(jax.nn.relu(dp - dn + margin))


if __name__ == "__main__":
    key = jax.random.PRNGKey(0)

    # Small shape consistent with the module: (batch, feature_dim)
    B, D = 16, 128
    k1, k2, k3, k4, k5, k6 = jax.random.split(key, 6)
    anchor = jax.random.normal(k1, (B, D), dtype=jnp.float32)
    positive = jax.random.normal(k2, (B, D), dtype=jnp.float32)
    negative = jax.random.normal(k3, (B, D), dtype=jnp.float32)

    out = triplet_loss(anchor, positive, negative, margin=1.0)
    out = jax.block_until_ready(out)
    ref = triplet_loss_ref(anchor, positive, negative, margin=1.0)
    assert jnp.allclose(out, ref, rtol=1e-4, atol=1e-3), (out, ref)

    # Also exercise the remainder / padding path with a non-aligned batch.
    B2 = 10
    a2 = jax.random.normal(k4, (B2, D), dtype=jnp.float32)
    p2 = jax.random.normal(k5, (B2, D), dtype=jnp.float32)
    n2 = jax.random.normal(k6, (B2, D), dtype=jnp.float32)
    out2 = jax.block_until_ready(triplet_loss(a2, p2, n2, margin=1.0))
    ref2 = triplet_loss_ref(a2, p2, n2, margin=1.0)
    assert jnp.allclose(out2, ref2, rtol=1e-4, atol=1e-3), (out2, ref2)

    print("KERNEL_OK")
</pallas_src>

<mosaic_0001>
module attributes {stable_mosaic.version = 11 : i64} {
  func.func @_triplet_row_loss_kernel(%arg0: i32, %arg1: memref<16x128xf32, #tpu.memory_space<vmem>>, %arg2: memref<16x128xf32, #tpu.memory_space<vmem>>, %arg3: memref<16x128xf32, #tpu.memory_space<vmem>>, %arg4: memref<16x1xf32, #tpu.memory_space<vmem>>) attributes {dimension_semantics = [#tpu.dimension_semantics<parallel>], iteration_bounds = array<i64: 1>, scalar_prefetch = 0 : i64, scratch_operands = 0 : i64, tpu.core_type = #tpu.core_type<tc>, window_params = [{transform_indices = @transform_0, window_bounds = array<i64: 16, 128>}, {transform_indices = @transform_1, window_bounds = array<i64: 16, 128>}, {transform_indices = @transform_2, window_bounds = array<i64: 16, 128>}, {transform_indices = @transform_3, window_bounds = array<i64: 16, 1>}]} {
    %c0 = arith.constant 0 : index
    %c0_0 = arith.constant 0 : index
    %0 = vector.load %arg1[%c0, %c0_0] : memref<16x128xf32, #tpu.memory_space<vmem>>, vector<16x128xf32>
    %c0_1 = arith.constant 0 : index
    %c0_2 = arith.constant 0 : index
    %1 = vector.load %arg2[%c0_1, %c0_2] : memref<16x128xf32, #tpu.memory_space<vmem>>, vector<16x128xf32>
    %c0_3 = arith.constant 0 : index
    %c0_4 = arith.constant 0 : index
    %2 = vector.load %arg3[%c0_3, %c0_4] : memref<16x128xf32, #tpu.memory_space<vmem>>, vector<16x128xf32>
    %3 = arith.subf %2, %1 : vector<16x128xf32>
    %cst = arith.constant 2.000000e+00 : f32
    %4 = vector.broadcast %cst : f32 to vector<16x128xf32>
    %5 = arith.mulf %4, %0 : vector<16x128xf32>
    %6 = arith.subf %5, %1 : vector<16x128xf32>
    %7 = arith.subf %6, %2 : vector<16x128xf32>
    %8 = arith.mulf %3, %7 : vector<16x128xf32>
    %cst_5 = arith.constant dense<0.000000e+00> : vector<16xf32>
    %9 = vector.multi_reduction <add>, %8, %cst_5 [1] : vector<16x128xf32> to vector<16xf32>
    %10 = vector.shape_cast %9 : vector<16xf32> to vector<16x1xf32>
    %cst_6 = arith.constant 1.000000e+00 : f32
    %11 = vector.broadcast %cst_6 : f32 to vector<16x1xf32>
    %12 = arith.addf %10, %11 : vector<16x1xf32>
    %cst_7 = arith.constant 0.000000e+00 : f32
    %13 = vector.broadcast %cst_7 : f32 to vector<16x1xf32>
    %14 = arith.maximumf %12, %13 : vector<16x1xf32>
    %c0_8 = arith.constant 0 : index
    %c0_9 = arith.constant 0 : index
    %15 = vector.load %arg4[%c0_8, %c0_9] : memref<16x1xf32, #tpu.memory_space<vmem>>, vector<16x1xf32>
    tpu.vector_store %arg4[%c0_8, %c0_9], %14 {strides = array<i32>} : memref<16x1xf32, #tpu.memory_space<vmem>>, vector<16x1xf32>,
    return
  }
  func.func @transform_0(%arg0: i32) -> (i32, i32) {
    %c0_i32 = arith.constant 0 : i32
    %c0_i32_0 = arith.constant 0 : i32
    return %arg0, %c0_i32 : i32, i32
  }
  func.func @transform_1(%arg0: i32) -> (i32, i32) {
    %c0_i32 = arith.constant 0 : i32
    %c0_i32_0 = arith.constant 0 : i32
    return %arg0, %c0_i32 : i32, i32
  }
  func.func @transform_2(%arg0: i32) -> (i32, i32) {
    %c0_i32 = arith.constant 0 : i32
    %c0_i32_0 = arith.constant 0 : i32
    return %arg0, %c0_i32 : i32, i32
  }
  func.func @transform_3(%arg0: i32) -> (i32, i32) {
    %c0_i32 = arith.constant 0 : i32
    %c0_i32_0 = arith.constant 0 : i32
    return %arg0, %c0_i32 : i32, i32
  }
}

</mosaic_0001>

<llo_original>
// kernel: tpu_custom_call.1
$region0: #{tpu_custom_call.1}
  #allocation0 [shape = 'u32[]', space=smem, size = 0x4, offset = 0x4, fixed_abs, tag = 'smem constant byte address 0x4 - core index']
  #allocation1 [shape = 'u32[72,128]{1,0:T(1,128)}', space=vmem, size = 0x9000, scoped, tag = 'internal scratch']
  %s0 = inlined_call_operand.hbm [shape: f32[16,128], index: 0, kind: input, shape index: {}]
  %s1 = inlined_call_operand.hbm [shape: f32[16,128], index: 1, kind: input, shape index: {}]
  %s2 = inlined_call_operand.hbm [shape: f32[16,128], index: 2, kind: input, shape index: {}]
  %s3 = inlined_call_operand.vmem [shape: f32[16,1], index: 3, kind: output, shape index: {}]
  %s4 = sld [smem:[#allocation0]]
  $region34: #{tpu_custom_call.1} parent=0
    _
  %s6 = ssub.s32 1, %s4
  %s7 = scalar_select 0, %s6, %s4
  $region1: #{tpu_custom_call.1} parent=0
    #allocation2 [shape = 'u8[8192]{0}', space=vmem, size = 0x2000, scoped, tag = 'input window, operand 0, single buffered']
    #allocation3 [shape = 's32[1]{0}', space=sflag, size = 0x4, scoped, tag = 'scoped memory for tpu_custom_call.1']
    #allocation4 [shape = 'u8[8192]{0}', space=vmem, size = 0x2000, scoped, tag = 'input window, operand 1, single buffered']
    #allocation5 [shape = 's32[1]{0}', space=sflag, size = 0x4, scoped, tag = 'scoped memory for tpu_custom_call.1']
    #allocation6 [shape = 'u8[8192]{0}', space=vmem, size = 0x2000, scoped, tag = 'input window, operand 2, single buffered']
    %8 = vsyncpa [#allocation3], 0
    %9 = vsyncpa [#allocation5], 0
    // Predicated region
    $region2: #{tpu_custom_call.1} parent=1 // pred_check
      _
    $region3: #{tpu_custom_call.1} parent=1 // pred_check_branch
      %11 = sbr.rel (0) target = $region5
    $region4: #{tpu_custom_call.1} parent=1 // pred_region
      %13 = vsyncadd [#allocation3], 0
      %s14 = sshll.u32 %s0, 4
      %s15 = int_to_ptr.hbm [resolvable:$true] %s14
      %s16 = sshll.u32 [#allocation2], 4
      %s17 = int_to_ptr.vmem [resolvable:$true] %s16
      %22 = dma.hbm_to_vmem [thread:$0]  %s15, 256, %s17, [#allocation3], 128, 128, 8
    $region5: #{tpu_custom_call.1} parent=1 // pred_fallthru
      _
    // Predicated region
    $region6: #{tpu_custom_call.1} parent=1 // pred_check
      _
    $region7: #{tpu_custom_call.1} parent=1 // pred_check_branch
      %24 = sbr.rel (0) target = $region9
    $region8: #{tpu_custom_call.1} parent=1 // pred_region
      %26 = vsyncadd [#allocation5], 0
      %s27 = sshll.u32 %s1, 4
      %s28 = int_to_ptr.hbm [resolvable:$true] %s27
      %s29 = sshll.u32 [#allocation4], 4
      %s30 = int_to_ptr.vmem [resolvable:$true] %s29
      %35 = dma.hbm_to_vmem [thread:$0]  %s28, 256, %s30, [#allocation5], 128, 128, 8
    $region9: #{tpu_custom_call.1} parent=1 // pred_fallthru
      _
    // Predicated region
    $region10: #{tpu_custom_call.1} parent=1 // pred_check
      _
    $region11: #{tpu_custom_call.1} parent=1 // pred_check_branch
      %37 = sbr.rel (0) target = $region13
    $region12: #{tpu_custom_call.1} parent=1 // pred_region
      %39 = vsyncadd [#allocation5], 0
      %s40 = sshll.u32 %s2, 4
      %s41 = int_to_ptr.hbm [resolvable:$true] %s40
      %s42 = sshll.u32 [#allocation6], 4
      %s43 = int_to_ptr.vmem [resolvable:$true] %s42
      %48 = dma.hbm_to_vmem [thread:$0]  %s41, 256, %s43, [#allocation5], 128, 128, 8
    $region13: #{tpu_custom_call.1} parent=1 // pred_fallthru
      _
    // Predicated region
    $region14: #{tpu_custom_call.1} parent=1 // pred_check
      _
    $region15: #{tpu_custom_call.1} parent=1 // pred_check_branch
      %50 = sbr.rel (0) target = $region17
    $region16: #{tpu_custom_call.1} parent=1 // pred_region
      %52 = dma.done [#allocation3], 256
    $region17: #{tpu_custom_call.1} parent=1 // pred_fallthru
      _
    // Predicated region
    $region18: #{tpu_custom_call.1} parent=1 // pred_check
      _
    $region19: #{tpu_custom_call.1} parent=1 // pred_check_branch
      %54 = sbr.rel (0) target = $region21
    $region20: #{tpu_custom_call.1} parent=1 // pred_region
      %56 = dma.done [#allocation5], 256
    $region21: #{tpu_custom_call.1} parent=1 // pred_fallthru
      _
    // Predicated region
    $region22: #{tpu_custom_call.1} parent=1 // pred_check
      _
    $region23: #{tpu_custom_call.1} parent=1 // pred_check_branch
      %58 = sbr.rel (0) target = $region25
    $region24: #{tpu_custom_call.1} parent=1 // pred_region
      %60 = dma.done [#allocation5], 256
    $region25: #{tpu_custom_call.1} parent=1 // pred_fallthru
      _
    %v61 = vld [vmem:[#allocation2] sm:$0xff]
    %v62 = vld [vmem:[#allocation2 + $0x8] sm:$0xff]
    %v63 = vld [vmem:[#allocation4] sm:$0xff]
    %v64 = vld [vmem:[#allocation4 + $0x8] sm:$0xff]
    %v65 = vld [vmem:[#allocation6] sm:$0xff]
    %v66 = vld [vmem:[#allocation6 + $0x8] sm:$0xff]
    %v67 = vsub.f32 %v65, %v63
    %v68 = vsub.f32 %v66, %v64
    %v69 = vmul.f32 %v61, 2.0
    %v70 = vmul.f32 %v62, 2.0
    %v71 = vsub.f32 %v69, %v63
    %v72 = vsub.f32 %v70, %v64
    %v73 = vsub.f32 %v71, %v65
    %v74 = vsub.f32 %v72, %v66
    %v75 = vmul.f32 %v67, %v73
    %v76 = vmul.f32 %v68, %v74
    %77 = vadd.xlane.f32.xlu0 %v75
    %v78 = vpop.xlane.xlu0 %77
    %79 = vadd.xlane.f32.xlu0 %v76
    %v80 = vpop.xlane.xlu0 %79
    %v81 = vadd.f32 %v78, 1.0
    %v82 = vadd.f32 %v80, 1.0
    %v83 = vmax.f32 %v81, 0.0
    %v84 = vmax.f32 %v82, 0.0
    %vm85 = vcmask 7168
    %86 = vst.msk [vmem:[%s3] sm:$0xff] %vm85, %v83
    %87 = vst.msk [vmem:[%s3 + $0x8] sm:$0xff] %vm85, %v84
    // Predicated region
    $region26: #{tpu_custom_call.1} parent=1 // pred_check
      _
    $region27: #{tpu_custom_call.1} parent=1 // pred_check_branch
      %89 = sbr.rel (0) target = $region29
    $region28: #{tpu_custom_call.1} parent=1 // pred_region
      _
    $region29: #{tpu_custom_call.1} parent=1 // pred_fallthru
      _
    // Predicated region
    $region30: #{tpu_custom_call.1} parent=1 // pred_check
      _
    $region31: #{tpu_custom_call.1} parent=1 // pred_check_branch
      %91 = sbr.rel (0) target = $region33
    $region32: #{tpu_custom_call.1} parent=1 // pred_region
      _
    $region33: #{tpu_custom_call.1} parent=1 // pred_fallthru
      _
    %92 = vsyncpa [#allocation3], 1
    %93 = vsyncpa [#allocation5], 1

</llo_original>
